<compile_context>
chip_gen: v5e
topology: v5e:2x2
jax: 0.10.0
libtpu: 0.0.40
codegen_flags: <defaults>
</compile_context>

<pallas_src>
import functools

import jax
import jax.numpy as jnp
from jax.experimental import pallas as pl
from jax.experimental.pallas import tpu as pltpu


def _round_up(n: int, m: int) -> int:
    return (n + m - 1) // m * m


def mlp_kernel(x_ref, w1_ref, b1_ref, w2_ref, b2_ref, o_ref, acc_ref):
    """One (batch-tile, H-chunk) grid step of relu(x@W1 + b1) @ W2 + b2."""
    k = pl.program_id(1)

    @pl.when(k == 0)
    def _():
        acc_ref[...] = jnp.zeros_like(acc_ref)

    # fc1 for this H-chunk: MXU matmul with f32 accumulation; x tile is cast
    # to the MXU dtype in VMEM (no HBM-side cast/pad copy of x).
    h = jnp.dot(x_ref[...].astype(w1_ref.dtype), w1_ref[...],
                preferred_element_type=jnp.float32)
    # Bias + ReLU in f32 on the VPU (v5e VPU has no bf16 path).
    h = jnp.maximum(h + b1_ref[...], 0.0)

    # fc2 partial product for this H-chunk, accumulated in the f32 VMEM scratch.
    acc_ref[...] += jnp.dot(h.astype(w2_ref.dtype), w2_ref[...],
                            preferred_element_type=jnp.float32)

    @pl.when(k == pl.num_programs(1) - 1)
    def _():
        # O_p is a multiple of 128 -> full lane-width (unmasked) store.
        o_ref[...] = (acc_ref[...] + b2_ref[...]).astype(o_ref.dtype)


def prepare_params(fc1_weight, fc1_bias, fc2_weight, fc2_bias,
                   matmul_dtype=jnp.bfloat16):
    """One-time (per model) parameter preparation.

    Takes PyTorch nn.Linear layout: fc*_weight is (out_features, in_features),
    fc*_bias is (out_features,).  Returns transposed (in, out) weights with H
    and O zero-padded to multiples of 128, cast to the MXU input dtype, plus
    the original output_size for slicing.  Doing this once at setup removes a
    full HBM read+write pass over the weights from every forward call.
    """
    md = jnp.dtype(matmul_dtype)
    H, In = fc1_weight.shape
    O, H2 = fc2_weight.shape
    assert H == H2, (fc1_weight.shape, fc2_weight.shape)
    H_p = _round_up(H, 128)
    O_p = _round_up(O, 128)
    w1 = jnp.zeros((In, H_p), md).at[:, :H].set(fc1_weight.T.astype(md))
    w2 = jnp.zeros((H_p, O_p), md).at[:H, :O].set(fc2_weight.T.astype(md))
    b1 = jnp.zeros((1, H_p), jnp.float32).at[:, :H].set(
        fc1_bias.astype(jnp.float32).reshape(1, H))
    b2 = jnp.zeros((1, O_p), jnp.float32).at[:, :O].set(
        fc2_bias.astype(jnp.float32).reshape(1, O))
    return w1, b1, w2, b2, O


def _default_vmem_limit_bytes() -> int:
    # ~3/4 of physical VMEM: ~96 MiB on v5e/v6e (128 MiB), ~48 MiB on v7x (64 MiB).
    try:
        cap = getattr(pltpu.get_tpu_info(), "vmem_capacity_bytes", None)
        if cap:
            return int(cap) * 3 // 4
    except Exception:
        pass
    return 48 * 1024 * 1024


def _choose_h_chunk(In, H_p, O_p, itemsize, budget_bytes=16 * 1024 * 1024):
    """Largest multiple of 128 that divides H_p whose W1/W2 slivers fit budget."""
    per_col = (In + O_p) * itemsize           # bytes per H column across W1+W2
    th = min(H_p, max(128, (budget_bytes // max(per_col, 1)) // 128 * 128))
    # TH must divide H_p exactly: a ragged last H-chunk would read out-of-bounds
    # weight data into the contraction and pollute the accumulator.
    while H_p % th:
        th -= 128
    return max(th, 128)


@functools.partial(jax.jit, static_argnames=("out_features", "batch_tile"))
def simple_model_forward(x, w1, b1, w2, b2, *, out_features, batch_tile=512):
    """Fused fc1 -> ReLU -> fc2 forward.

    x:  (B, In), any float dtype (cast to the MXU dtype inside the kernel).
    w1: (In, H_p), b1: (1, H_p), w2: (H_p, O_p), b2: (1, O_p) from prepare_params.
    """
    B, In = x.shape
    In_w, H_p = w1.shape
    H_w, O_p = w2.shape
    assert In == In_w and H_p == H_w, (x.shape, w1.shape, w2.shape)
    out_dtype = x.dtype
    md_itemsize = jnp.dtype(w1.dtype).itemsize

    # Batch tile: sublane-aligned for x's dtype, default up to 512 rows
    # (amortizes the ~0.35us/step grid overhead; ~85% HBM roofline vs ~29% @128).
    sub = {4: 8, 2: 16, 1: 32}.get(jnp.dtype(x.dtype).itemsize, 8)
    if B < sub:
        TB = B                                     # block dim == full array dim is legal
    else:
        TB = min(_round_up(B, sub), _round_up(batch_tile, sub))
        TB = max(sub, (TB // sub) * sub)           # robust to odd batch_tile values
        if pl.cdiv(B, TB) < 2 and B > sub:
            # Keep >= 2 batch tiles so both v7x TensorCores get work.
            TB = max(sub, _round_up(pl.cdiv(B, 2), sub))
    n_b = pl.cdiv(B, TB)

    # H-chunking over a trailing "arbitrary" axis so resident weight slivers
    # stay within a ~16 MiB budget (v7x 64 MiB VMEM); TH == H_p at small sizes.
    TH = _choose_h_chunk(In, H_p, O_p, md_itemsize)
    n_h = H_p // TH

    flops = 2 * B * H_p * (In + O_p)
    bytes_accessed = (
        B * In * jnp.dtype(x.dtype).itemsize          # x
        + (In * H_p + H_p * O_p) * md_itemsize        # weights
        + (H_p + O_p) * 4                             # biases (f32)
        + B * O_p * jnp.dtype(out_dtype).itemsize)    # output

    out_padded = pl.pallas_call(
        mlp_kernel,
        out_shape=jax.ShapeDtypeStruct((B, O_p), out_dtype),
        grid_spec=pltpu.PrefetchScalarGridSpec(
            num_scalar_prefetch=0,
            grid=(n_b, n_h),
            in_specs=[
                # x: tiled over batch; last block dim == full In (unpadded).
                pl.BlockSpec((TB, In), lambda i, k: (i, 0)),
                # Weights/biases: constant batch index -> VMEM-resident across
                # batch tiles; chunked along H.  (pipeline_mode=pl.Buffered(1)
                # would halve their VMEM footprint; irrelevant at these sizes.)
                pl.BlockSpec((In, TH), lambda i, k: (0, k)),   # w1 sliver
                pl.BlockSpec((1, TH), lambda i, k: (0, k)),    # b1 sliver
                pl.BlockSpec((TH, O_p), lambda i, k: (k, 0)),  # w2 sliver
                pl.BlockSpec((1, O_p), lambda i, k: (0, 0)),   # b2
            ],
            out_specs=pl.BlockSpec((TB, O_p), lambda i, k: (i, 0)),
            scratch_shapes=[pltpu.VMEM((TB, O_p), jnp.float32)],  # f32 accumulator
        ),
        compiler_params=pltpu.CompilerParams(
            dimension_semantics=("parallel", "arbitrary"),
            vmem_limit_bytes=_default_vmem_limit_bytes(),
        ),
        cost_estimate=pl.CostEstimate(
            flops=flops, transcendentals=0, bytes_accessed=bytes_accessed),
    )(x, w1, b1, w2, b2)

    # Slice off the lane padding on the output features outside the kernel.
    # TODO(synk): optionally emit bf16 output to halve output HBM write bytes.
    return out_padded[:, :out_features]


if __name__ == "__main__":
    # Small shapes consistent with the module.
    batch, input_size, hidden_size, output_size = 8, 32, 64, 16

    key = jax.random.PRNGKey(0)
    kx, kw1, kb1, kw2, kb2 = jax.random.split(key, 5)

    x = jax.random.normal(kx, (batch, input_size), dtype=jnp.float32)

    # PyTorch nn.Linear layout: weight (out_features, in_features), bias (out,).
    fc1_w = jax.random.normal(kw1, (hidden_size, input_size), jnp.float32) * 0.1
    fc1_b = jax.random.normal(kb1, (hidden_size,), jnp.float32) * 0.1
    fc2_w = jax.random.normal(kw2, (output_size, hidden_size), jnp.float32) * 0.1
    fc2_b = jax.random.normal(kb2, (output_size,), jnp.float32) * 0.1

    ref = jnp.maximum(x @ fc1_w.T + fc1_b, 0.0) @ fc2_w.T + fc2_b

    # f32 MXU path (exact vs. reference).
    w1, b1, w2, b2, O = prepare_params(fc1_w, fc1_b, fc2_w, fc2_b,
                                       matmul_dtype=jnp.float32)
    out = jax.block_until_ready(
        simple_model_forward(x, w1, b1, w2, b2, out_features=O))
    assert out.shape == (batch, output_size), out.shape
    assert jnp.allclose(out, ref, atol=1e-5, rtol=1e-5), "f32 mismatch vs reference"

    # bf16 MXU-input path (default; recommended on v5e/v6e/v7x), f32 accumulation.
    w1, b1, w2, b2, O = prepare_params(fc1_w, fc1_b, fc2_w, fc2_b)
    out_bf16 = jax.block_until_ready(
        simple_model_forward(x, w1, b1, w2, b2, out_features=O))
    assert out_bf16.shape == (batch, output_size), out_bf16.shape
    assert jnp.allclose(out_bf16, ref, atol=5e-2, rtol=5e-2), "bf16 mismatch vs reference"

    print("KERNEL_OK")
</pallas_src>

<mosaic_0001>
module attributes {stable_mosaic.version = 11 : i64} {
  func.func @mlp_kernel(%arg0: i32, %arg1: i32, %arg2: memref<8x32xf32, #tpu.memory_space<vmem>>, %arg3: memref<32x128xf32, #tpu.memory_space<vmem>>, %arg4: memref<1x128xf32, #tpu.memory_space<vmem>>, %arg5: memref<128x128xf32, #tpu.memory_space<vmem>>, %arg6: memref<1x128xf32, #tpu.memory_space<vmem>>, %arg7: memref<8x128xf32, #tpu.memory_space<vmem>>, %arg8: memref<8x128xf32, #tpu.memory_space<vmem>>) attributes {dimension_semantics = [#tpu.dimension_semantics<parallel>, #tpu.dimension_semantics<arbitrary>], iteration_bounds = array<i64: 1, 1>, scalar_prefetch = 0 : i64, scratch_operands = 1 : i64, tpu.core_type = #tpu.core_type<tc>, window_params = [{transform_indices = @transform_0, window_bounds = array<i64: 8, 32>}, {transform_indices = @transform_1, window_bounds = array<i64: 32, 128>}, {transform_indices = @transform_2, window_bounds = array<i64: 1, 128>}, {transform_indices = @transform_3, window_bounds = array<i64: 128, 128>}, {pipeline_mode = #tpu.pipeline_mode<synchronous>, transform_indices = @transform_4, window_bounds = array<i64: 1, 128>}, {transform_indices = @transform_5, window_bounds = array<i64: 8, 128>}]} {
    %c0_i32 = arith.constant 0 : i32
    %0 = arith.cmpi eq, %arg1, %c0_i32 : i32
    %1 = arith.extui %0 : i1 to i32
    %c0_i32_0 = arith.constant 0 : i32
    %2 = arith.cmpi ne, %1, %c0_i32_0 : i32
    scf.if %2 {
      %cst_16 = arith.constant 0.000000e+00 : f32
      %19 = vector.broadcast %cst_16 : f32 to vector<8x128xf32>
      %c0_17 = arith.constant 0 : index
      %c0_18 = arith.constant 0 : index
      %20 = vector.load %arg8[%c0_17, %c0_18] : memref<8x128xf32, #tpu.memory_space<vmem>>, vector<8x128xf32>
      tpu.vector_store %arg8[%c0_17, %c0_18], %19 {strides = array<i32>} : memref<8x128xf32, #tpu.memory_space<vmem>>, vector<8x128xf32>,
    } else {
    }
    %c0 = arith.constant 0 : index
    %c0_1 = arith.constant 0 : index
    %3 = vector.load %arg2[%c0, %c0_1] : memref<8x32xf32, #tpu.memory_space<vmem>>, vector<8x32xf32>
    %c0_2 = arith.constant 0 : index
    %c0_3 = arith.constant 0 : index
    %4 = vector.load %arg3[%c0_2, %c0_3] : memref<32x128xf32, #tpu.memory_space<vmem>>, vector<32x128xf32>
    %cst = arith.constant dense<0.000000e+00> : vector<8x128xf32>
    %5 = tpu.matmul %3, %4, %cst {dimension_numbers = #tpu.dot_dimension_numbers<[1], [0], [0], [1], [0, 0, 1, 1], [], []>} : vector<8x32xf32>, vector<32x128xf32>, vector<8x128xf32> -> vector<8x128xf32>
    %c0_4 = arith.constant 0 : index
    %c0_5 = arith.constant 0 : index
    %6 = vector.load %arg4[%c0_4, %c0_5] : memref<1x128xf32, #tpu.memory_space<vmem>>, vector<1x128xf32>
    %7 = vector.broadcast %6 : vector<1x128xf32> to vector<8x128xf32>
    %8 = arith.addf %5, %7 : vector<8x128xf32>
    %cst_6 = arith.constant 0.000000e+00 : f32
    %9 = vector.broadcast %cst_6 : f32 to vector<8x128xf32>
    %10 = arith.maximumf %8, %9 : vector<8x128xf32>
    %c0_7 = arith.constant 0 : index
    %c0_8 = arith.constant 0 : index
    %11 = vector.load %arg8[%c0_7, %c0_8] : memref<8x128xf32, #tpu.memory_space<vmem>>, vector<8x128xf32>
    %c0_9 = arith.constant 0 : index
    %c0_10 = arith.constant 0 : index
    %12 = vector.load %arg5[%c0_9, %c0_10] : memref<128x128xf32, #tpu.memory_space<vmem>>, vector<128x128xf32>
    %cst_11 = arith.constant dense<0.000000e+00> : vector<8x128xf32>
    %13 = tpu.matmul %10, %12, %cst_11 {dimension_numbers = #tpu.dot_dimension_numbers<[1], [0], [0], [1], [0, 0, 1, 1], [], []>} : vector<8x128xf32>, vector<128x128xf32>, vector<8x128xf32> -> vector<8x128xf32>
    %14 = arith.addf %11, %13 : vector<8x128xf32>
    %c0_12 = arith.constant 0 : index
    %c0_13 = arith.constant 0 : index
    %15 = vector.load %arg8[%c0_12, %c0_13] : memref<8x128xf32, #tpu.memory_space<vmem>>, vector<8x128xf32>
    tpu.vector_store %arg8[%c0_12, %c0_13], %14 {strides = array<i32>} : memref<8x128xf32, #tpu.memory_space<vmem>>, vector<8x128xf32>,
    %c0_i32_14 = arith.constant 0 : i32
    %16 = arith.cmpi eq, %arg1, %c0_i32_14 : i32
    %17 = arith.extui %16 : i1 to i32
    %c0_i32_15 = arith.constant 0 : i32
    %18 = arith.cmpi ne, %17, %c0_i32_15 : i32
    scf.if %18 {
      %c0_16 = arith.constant 0 : index
      %c0_17 = arith.constant 0 : index
      %19 = vector.load %arg8[%c0_16, %c0_17] : memref<8x128xf32, #tpu.memory_space<vmem>>, vector<8x128xf32>
      %c0_18 = arith.constant 0 : index
      %c0_19 = arith.constant 0 : index
      %20 = vector.load %arg6[%c0_18, %c0_19] : memref<1x128xf32, #tpu.memory_space<vmem>>, vector<1x128xf32>
      %21 = vector.broadcast %20 : vector<1x128xf32> to vector<8x128xf32>
      %22 = arith.addf %19, %21 : vector<8x128xf32>
      %c0_20 = arith.constant 0 : index
      %c0_21 = arith.constant 0 : index
      %23 = vector.load %arg7[%c0_20, %c0_21] : memref<8x128xf32, #tpu.memory_space<vmem>>, vector<8x128xf32>
      tpu.vector_store %arg7[%c0_20, %c0_21], %22 {strides = array<i32>} : memref<8x128xf32, #tpu.memory_space<vmem>>, vector<8x128xf32>,
    } else {
    }
    return
  }
  func.func @transform_0(%arg0: i32, %arg1: i32) -> (i32, i32) {
    %c0_i32 = arith.constant 0 : i32
    %c0_i32_0 = arith.constant 0 : i32
    return %arg0, %c0_i32 : i32, i32
  }
  func.func @transform_1(%arg0: i32, %arg1: i32) -> (i32, i32) {
    %c0_i32 = arith.constant 0 : i32
    %c0_i32_0 = arith.constant 0 : i32
    return %c0_i32, %arg1 : i32, i32
  }
  func.func @transform_2(%arg0: i32, %arg1: i32) -> (i32, i32) {
    %c0_i32 = arith.constant 0 : i32
    %c0_i32_0 = arith.constant 0 : i32
    return %c0_i32, %arg1 : i32, i32
  }
  func.func @transform_3(%arg0: i32, %arg1: i32) -> (i32, i32) {
    %c0_i32 = arith.constant 0 : i32
    %c0_i32_0 = arith.constant 0 : i32
    return %arg1, %c0_i32 : i32, i32
  }
  func.func @transform_4(%arg0: i32, %arg1: i32) -> (i32, i32) {
    %c0_i32 = arith.constant 0 : i32
    %c0_i32_0 = arith.constant 0 : i32
    %c0_i32_1 = arith.constant 0 : i32
    return %c0_i32, %c0_i32_0 : i32, i32
  }
  func.func @transform_5(%arg0: i32, %arg1: i32) -> (i32, i32) {
    %c0_i32 = arith.constant 0 : i32
    %c0_i32_0 = arith.constant 0 : i32
    return %arg0, %c0_i32 : i32, i32
  }
}

</mosaic_0001>

<llo_original>
// kernel: simple_model_forward.1
$region0: #{simple_model_forward.1}
  #allocation0 [shape = 'u32[]', space=smem, size = 0x4, offset = 0x4, fixed_abs, tag = 'smem constant byte address 0x4 - core index']
  #allocation1 [shape = 'u32[72,128]{1,0:T(1,128)}', space=vmem, size = 0x9000, scoped, tag = 'internal scratch']
  #allocation2 [shape = 'f32[8,128]{1,0:T(8,128)}', space=vmem, size = 0x1000, scoped, tag = 'scratch operand']
  %s0 = inlined_call_operand.hbm [shape: f32[8,32], index: 0, kind: input, shape index: {}]
  %s1 = inlined_call_operand.hbm [shape: f32[32,128], index: 1, kind: input, shape index: {}]
  %s2 = inlined_call_operand.vmem [shape: f32[1,128], index: 2, kind: input, shape index: {}]
  %s3 = inlined_call_operand.hbm [shape: f32[128,128], index: 3, kind: input, shape index: {}]
  %s4 = inlined_call_operand.vmem [shape: f32[1,128], index: 4, kind: input, shape index: {}]
  %s5 = inlined_call_operand.hbm [shape: f32[8,128], index: 5, kind: output, shape index: {}]
  %s6 = sld [smem:[#allocation0]]
  $region50: #{simple_model_forward.1} parent=0
    _
  %s8 = ssub.s32 1, %s6
  %s9 = scalar_select 0, %s8, %s6
  $region1: #{simple_model_forward.1} parent=0
    #allocation3 [shape = 'u8[4096]{0}', space=vmem, size = 0x1000, scoped, tag = 'input window, operand 0, single buffered']
    #allocation4 [shape = 's32[1]{0}', space=sflag, size = 0x4, scoped, tag = 'scoped memory for simple_model_forward.1']
    #allocation5 [shape = 's32[1]{0}', space=sflag, size = 0x4, scoped, tag = 'scoped memory for simple_model_forward.1']
    #allocation6 [shape = 'u8[16384]{0}', space=vmem, size = 0x4000, scoped, tag = 'input window, operand 1, single buffered']
    #allocation7 [shape = 's32[1]{0}', space=sflag, size = 0x4, scoped, tag = 'scoped memory for simple_model_forward.1']
    #allocation8 [shape = 'u8[65536]{0}', space=vmem, size = 0x10000, scoped, tag = 'input window, operand 3, single buffered']
    #allocation9 [shape = 'u8[4096]{0}', space=vmem, size = 0x1000, scoped, tag = 'output window, operand 0, single buffered']
    %10 = vsyncpa [#allocation4], 0
    %11 = vsyncpa [#allocation7], 0
    %12 = vsyncpa [#allocation5], 0
    // Predicated region
    $region2: #{simple_model_forward.1} parent=1 // pred_check
      _
    $region3: #{simple_model_forward.1} parent=1 // pred_check_branch
      %14 = sbr.rel (0) target = $region5
    $region4: #{simple_model_forward.1} parent=1 // pred_region
      %16 = vsyncadd [#allocation4], 0
      %s18 = sshll.u32 %s0, 4
      %s19 = int_to_ptr.hbm [resolvable:$true] %s18
      %s20 = sshll.u32 [#allocation3], 4
      %s21 = int_to_ptr.vmem [resolvable:$true] %s20
      %23 = dma.hbm_to_vmem [thread:$0]  %s19, 128, %s21, [#allocation4]
    $region5: #{simple_model_forward.1} parent=1 // pred_fallthru
      _
    // Predicated region
    $region6: #{simple_model_forward.1} parent=1 // pred_check
      _
    $region7: #{simple_model_forward.1} parent=1 // pred_check_branch
      %25 = sbr.rel (0) target = $region9
    $region8: #{simple_model_forward.1} parent=1 // pred_region
      %27 = vsyncadd [#allocation7], 0
      %s28 = sshll.u32 %s1, 4
      %s29 = int_to_ptr.hbm [resolvable:$true] %s28
      %s30 = sshll.u32 [#allocation6], 4
      %s31 = int_to_ptr.vmem [resolvable:$true] %s30
      %36 = dma.hbm_to_vmem [thread:$0]  %s29, 512, %s31, [#allocation7], 128, 128, 8
    $region9: #{simple_model_forward.1} parent=1 // pred_fallthru
      _
    // Predicated region
    $region10: #{simple_model_forward.1} parent=1 // pred_check
      _
    $region11: #{simple_model_forward.1} parent=1 // pred_check_branch
      %38 = sbr.rel (0) target = $region13
    $region12: #{simple_model_forward.1} parent=1 // pred_region
      _
    $region13: #{simple_model_forward.1} parent=1 // pred_fallthru
      _
    // Predicated region
    $region14: #{simple_model_forward.1} parent=1 // pred_check
      _
    $region15: #{simple_model_forward.1} parent=1 // pred_check_branch
      %40 = sbr.rel (0) target = $region17
    $region16: #{simple_model_forward.1} parent=1 // pred_region
      %42 = vsyncadd [#allocation7], 0
      %s43 = sshll.u32 %s3, 4
      %s44 = int_to_ptr.hbm [resolvable:$true] %s43
      %s45 = sshll.u32 [#allocation8], 4
      %s46 = int_to_ptr.vmem [resolvable:$true] %s45
      %51 = dma.hbm_to_vmem [thread:$0]  %s44, 2048, %s46, [#allocation7], 128, 128, 8
    $region17: #{simple_model_forward.1} parent=1 // pred_fallthru
      _
    // Predicated region
    $region18: #{simple_model_forward.1} parent=1 // pred_check
      _
    $region19: #{simple_model_forward.1} parent=1 // pred_check_branch
      %53 = sbr.rel (0) target = $region21
    $region20: #{simple_model_forward.1} parent=1 // pred_region
      _
    $region21: #{simple_model_forward.1} parent=1 // pred_fallthru
      _
    // Predicated region
    $region22: #{simple_model_forward.1} parent=1 // pred_check
      _
    $region23: #{simple_model_forward.1} parent=1 // pred_check_branch
      %55 = sbr.rel (0) target = $region25
    $region24: #{simple_model_forward.1} parent=1 // pred_region
      %57 = dma.done [#allocation4], 128
    $region25: #{simple_model_forward.1} parent=1 // pred_fallthru
      _
    // Predicated region
    $region26: #{simple_model_forward.1} parent=1 // pred_check
      _
    $region27: #{simple_model_forward.1} parent=1 // pred_check_branch
      %59 = sbr.rel (0) target = $region29
    $region28: #{simple_model_forward.1} parent=1 // pred_region
      %61 = dma.done [#allocation7], 512
    $region29: #{simple_model_forward.1} parent=1 // pred_fallthru
      _
    // Predicated region
    $region30: #{simple_model_forward.1} parent=1 // pred_check
      _
    $region31: #{simple_model_forward.1} parent=1 // pred_check_branch
      %63 = sbr.rel (0) target = $region33
    $region32: #{simple_model_forward.1} parent=1 // pred_region
      %65 = dma.done [#allocation7], 2048
    $region33: #{simple_model_forward.1} parent=1 // pred_fallthru
      _
    %p66 = scmp.eq.s32.totalorder 0, 0
    // Predicated region
    $region34: #{simple_model_forward.1} parent=1 // pred_check
      %p67 = pneg %p66
    $region35: #{simple_model_forward.1} parent=1 // pred_check_branch
      %69 = sbr.rel (%p67) target = $region37
    $region36: #{simple_model_forward.1} parent=1 // pred_region
      %70 = vst [vmem:[#allocation2] sm:$0xff] 0.0
    $region37: #{simple_model_forward.1} parent=1 // pred_fallthru
      _
    %v71 = vld [vmem:[#allocation3] sm:$0xff]
    %v72 = vld [vmem:[#allocation6] sm:$0xff]
    %v73 = vld [vmem:[#allocation6 + $0x8] sm:$0xff]
    %v74 = vld [vmem:[#allocation6 + $0x10] sm:$0xff]
    %v75 = vld [vmem:[#allocation6 + $0x18] sm:$0xff]
    %v76 = vld [vmem:[%s2] sm:$0x1]
    %v78 = vperm.slane %v76, 0
    %vm80 = vcmask 261120
    %v82 = vsel %vm80, %v71, 0
    %84 = vmatpush.msra.mxu0 0.0
    %85 = vmatpush.msra.mxu0 0.0
    %86 = vmatpush.msra.mxu0 0.0
    %87 = vmatpush.msra.mxu0 0.0
    %88 = vmatpush.msra.mxu0 0.0
    %89 = vmatpush.msra.mxu0 0.0
    %90 = vmatpush.msra.mxu0 0.0
    %91 = vmatpush.msra.mxu0 0.0
    %92 = vmatpush.msra.mxu0 0.0
    %93 = vmatpush.msra.mxu0 0.0
    %94 = vmatpush.msra.mxu0 0.0
    %95 = vmatpush.msra.mxu0 0.0
    %96 = vmatpush.msra.mxu0 %v75
    %97 = vmatpush.msra.mxu0 %v74
    %98 = vmatpush.msra.mxu0 %v73
    %99 = vmatpush.msra.mxu0 %v72
    %100 = vmatmul.f32.gmra.mxu0 %v82
    %v101 = vpop.f32.mrf.mxu0
    %v102 = vadd.f32 %v78, %v101
    %103 = vdwg.mxu0
    %v104 = vmax.f32 %v102, 0.0
    %v105 = vld [vmem:[#allocation2] sm:$0xff]
    %v106 = vld [vmem:[#allocation8] sm:$0xff]
    %v107 = vld [vmem:[#allocation8 + $0x8] sm:$0xff]
    %v108 = vld [vmem:[#allocation8 + $0x10] sm:$0xff]
    %v109 = vld [vmem:[#allocation8 + $0x18] sm:$0xff]
    %v110 = vld [vmem:[#allocation8 + $0x20] sm:$0xff]
    %v111 = vld [vmem:[#allocation8 + $0x28] sm:$0xff]
    %v112 = vld [vmem:[#allocation8 + $0x30] sm:$0xff]
    %v113 = vld [vmem:[#allocation8 + $0x38] sm:$0xff]
    %v114 = vld [vmem:[#allocation8 + $0x40] sm:$0xff]
    %v115 = vld [vmem:[#allocation8 + $0x48] sm:$0xff]
    %v116 = vld [vmem:[#allocation8 + $0x50] sm:$0xff]
    %v117 = vld [vmem:[#allocation8 + $0x58] sm:$0xff]
    %v118 = vld [vmem:[#allocation8 + $0x60] sm:$0xff]
    %v119 = vld [vmem:[#allocation8 + $0x68] sm:$0xff]
    %v120 = vld [vmem:[#allocation8 + $0x70] sm:$0xff]
    %v121 = vld [vmem:[#allocation8 + $0x78] sm:$0xff]
    %122 = vmatpush.msra.mxu0 %v121
    %123 = vmatpush.msra.mxu0 %v120
    %124 = vmatpush.msra.mxu0 %v119
    %125 = vmatpush.msra.mxu0 %v118
    %126 = vmatpush.msra.mxu0 %v117
    %127 = vmatpush.msra.mxu0 %v116
    %128 = vmatpush.msra.mxu0 %v115
    %129 = vmatpush.msra.mxu0 %v114
    %130 = vmatpush.msra.mxu0 %v113
    %131 = vmatpush.msra.mxu0 %v112
    %132 = vmatpush.msra.mxu0 %v111
    %133 = vmatpush.msra.mxu0 %v110
    %134 = vmatpush.msra.mxu0 %v109
    %135 = vmatpush.msra.mxu0 %v108
    %136 = vmatpush.msra.mxu0 %v107
    %137 = vmatpush.msra.mxu0 %v106
    %138 = vmatmul.f32.gmra.mxu0 %v104
    %v139 = vpop.f32.mrf.mxu0
    %v140 = vadd.f32 0.0, %v139
    %141 = vdwg.mxu0
    %v142 = vadd.f32 %v105, %v140
    %143 = vst [vmem:[#allocation2] sm:$0xff] %v142
    // Predicated region
    $region38: #{simple_model_forward.1} parent=1 // pred_check
      %p144 = pneg %p66
    $region39: #{simple_model_forward.1} parent=1 // pred_check_branch
      %146 = sbr.rel (%p144) target = $region41
    $region40: #{simple_model_forward.1} parent=1 // pred_region
      %v147 = vld [vmem:[#allocation2] sm:$0xff]
      %v148 = vld [vmem:[%s4] sm:$0x1]
      %v150 = vperm.slane %v148, 0
      %v152 = vadd.f32 %v147, %v150
      %153 = vst [vmem:[#allocation9] sm:$0xff] %v152
    $region41: #{simple_model_forward.1} parent=1 // pred_fallthru
      _
    // Predicated region
    $region42: #{simple_model_forward.1} parent=1 // pred_check
      _
    $region43: #{simple_model_forward.1} parent=1 // pred_check_branch
      %155 = sbr.rel (0) target = $region45
    $region44: #{simple_model_forward.1} parent=1 // pred_region
      %157 = vsyncadd [#allocation5], 0
      %s159 = sshll.u32 [#allocation9], 4
      %s160 = int_to_ptr.vmem [resolvable:$true] %s159
      %s161 = sshll.u32 %s5, 4
      %s162 = int_to_ptr.hbm [resolvable:$true] %s161
      %164 = dma.vmem_to_hbm [thread:$0]  %s160, 128, %s162, [#allocation5]
    $region45: #{simple_model_forward.1} parent=1 // pred_fallthru
      _
    // Predicated region
    $region46: #{simple_model_forward.1} parent=1 // pred_check
      _
    $region47: #{simple_model_forward.1} parent=1 // pred_check_branch
      %166 = sbr.rel (0) target = $region49
    $region48: #{simple_model_forward.1} parent=1 // pred_region
      %168 = dma.done [#allocation5], 128
    $region49: #{simple_model_forward.1} parent=1 // pred_fallthru
      _
    %169 = vsyncpa [#allocation4], 1
    %170 = vsyncpa [#allocation7], 1
    %171 = vsyncpa [#allocation5], 1

</llo_original>
